<compile_context>
chip_gen: v7x
topology: tpu7x:2x2x1
jax: 0.10.0
libtpu: 0.0.40
codegen_flags: <defaults>
</compile_context>

<pallas_src>
import functools

import jax
import jax.numpy as jnp
from jax.experimental import pallas as pl
from jax.experimental.pallas import tpu as pltpu


def _relumax_kernel(x_ref, o_ref, *, max_value):
    x = x_ref[...]
    zero = jnp.zeros((), dtype=x.dtype)
    mx = jnp.asarray(max_value, dtype=x.dtype)
    # clamp(x, 0, max) == min(max(x, 0), max)  -- two VPU ops per vreg.
    o_ref[...] = jnp.minimum(jnp.maximum(x, zero), mx)


# Below this many elements, pallas_call launch + wrapper overhead dominates;
# a plain fused XLA clamp is faster.
_MIN_KERNEL_ELEMS = 128 * 1024


def _clip_ref(x, max_value):
    """Plain-XLA clamp with the same dtype semantics as the kernel."""
    dtype = x.dtype
    return jnp.minimum(
        jnp.maximum(x, jnp.zeros((), dtype)), jnp.asarray(max_value, dtype)
    )


def _block_bytes_and_vmem_limit():
    """Per-generation block size (per array) and scoped-VMEM override."""
    kind = ""
    try:
        kind = jax.devices()[0].device_kind.lower()
    except Exception:  # pragma: no cover - defensive; fall through to default
        pass
    if "v7" in kind:
        # 3.2 TB/s HBM makes the ~0.35us per-step cost proportionally large;
        # 8 MiB blocks -> 2 bufs x (in+out) x 8 = 32 MiB, under 64 MiB physical
        # but above the 32 MiB default scope, so raise the limit explicitly.
        return 8 << 20, 48 << 20
    if "v6" in kind:
        # ~1-2% win at most; free once the scoped limit is raised (128 MiB phys).
        return 4 << 20, 64 << 20
    # v5e / unknown: 2 MiB blocks -> 8 MiB double-buffered footprint, inside the
    # 16 MiB default scoped VMEM, so no override needed.
    return 2 << 20, None


def relumax(x, max_value=6.0, *, donate_input=False):
    """Apply clamp(x, 0, max_value) elementwise.

    x: array of any shape / float dtype. Returns same shape/dtype.
    donate_input: only set True if the caller has genuinely donated x (e.g. via
    jit donate_argnums) -- otherwise XLA inserts a defensive copy that defeats
    the aliasing.
    """
    orig_shape = x.shape
    dtype = x.dtype
    total = x.size

    # Small-input fast path (also covers empty tensors).
    if total < _MIN_KERNEL_ELEMS:
        return _clip_ref(x, max_value)

    # Largest lane-dense width (multiple of 128) that divides the element
    # count, so the 2-D reshape is a free layout-preserving bitcast.
    cols = None
    for c in (1024, 512, 256, 128):
        if total % c == 0:
            cols = c
            break
    if cols is None:
        # Ragged total: a standalone XLA clamp is already one HBM read+write
        # (same roofline as the kernel) and avoids any pad/slice copies.
        return _clip_ref(x, max_value)

    itemsize = jnp.dtype(dtype).itemsize
    # dtype-aware sublane multiple: 8 for 4-byte, 16 for 2-byte, 32 for 1-byte.
    sublane = max(8, 32 // itemsize)

    rows = total // cols
    block_bytes, vmem_limit = _block_bytes_and_vmem_limit()

    # Row-tile of ~block_bytes, rounded to the sublane multiple, never larger
    # than the rows actually present (partial last block handles the rest).
    block_rows = max(sublane, (block_bytes // (cols * itemsize)) // sublane * sublane)
    if rows >= sublane:
        block_rows = min(block_rows, (rows // sublane) * sublane)

    x2d = x.reshape(rows, cols)  # free: contiguous, layout-preserving

    grid = (pl.cdiv(rows, block_rows),)  # last block may be partial (masked)
    kernel = functools.partial(_relumax_kernel, max_value=max_value)

    extra = {}
    if donate_input:
        extra["input_output_aliases"] = {0: 0}

    cp_kwargs = {"dimension_semantics": ("parallel",)}
    if vmem_limit is not None:
        cp_kwargs["vmem_limit_bytes"] = vmem_limit

    out2d = pl.pallas_call(
        kernel,
        out_shape=jax.ShapeDtypeStruct((rows, cols), dtype),
        grid_spec=pltpu.PrefetchScalarGridSpec(
            num_scalar_prefetch=0,
            grid=grid,
            in_specs=[pl.BlockSpec((block_rows, cols), lambda i: (i, 0))],
            out_specs=pl.BlockSpec((block_rows, cols), lambda i: (i, 0)),
        ),
        compiler_params=pltpu.CompilerParams(**cp_kwargs),
        **extra,
    )(x2d)

    return out2d.reshape(orig_shape)


if __name__ == "__main__":
    max_value = 6.0

    # Case 1: small NCHW f32 activation (fast path), values exercise both
    # clamp bounds.
    k1 = jax.random.PRNGKey(0)
    x1 = jax.random.normal(k1, (2, 4, 16, 16), dtype=jnp.float32) * 5.0
    y1 = jax.block_until_ready(relumax(x1, max_value))
    ref1 = jnp.clip(x1, 0.0, max_value)
    assert y1.shape == x1.shape and y1.dtype == x1.dtype
    assert jnp.allclose(y1, ref1), "mismatch vs reference clamp (f32 small)"

    # Case 2: kernel path, element count divisible by 1024 (zero-copy reshape).
    k2 = jax.random.PRNGKey(1)
    x2 = jax.random.normal(k2, (2, 32, 64, 64), dtype=jnp.float32) * 5.0
    y2 = jax.block_until_ready(relumax(x2, max_value))
    ref2 = jnp.clip(x2, 0.0, max_value)
    assert y2.shape == x2.shape and y2.dtype == x2.dtype
    assert jnp.allclose(y2, ref2), "mismatch vs reference clamp (f32 kernel)"

    # Case 3: kernel path in bf16 with cols=256 and a partial last block
    # (rows=625 not a multiple of the block size) -- exercises masked tail.
    k3 = jax.random.PRNGKey(2)
    x3 = (jax.random.normal(k3, (2, 8, 100, 100), dtype=jnp.float32) * 5.0
          ).astype(jnp.bfloat16)
    y3 = jax.block_until_ready(relumax(x3, max_value))
    ref3 = jnp.clip(x3, 0.0, max_value)
    assert y3.shape == x3.shape and y3.dtype == x3.dtype
    assert jnp.allclose(y3.astype(jnp.float32), ref3.astype(jnp.float32)), \
        "mismatch vs reference clamp (bf16 partial block)"

    # Case 4: ragged element count (not a multiple of 128) -> clip fallback.
    k4 = jax.random.PRNGKey(3)
    x4 = jax.random.normal(k4, (2, 3, 14, 14), dtype=jnp.float32) * 5.0
    y4 = jax.block_until_ready(relumax(x4, max_value))
    ref4 = jnp.clip(x4, 0.0, max_value)
    assert y4.shape == x4.shape and y4.dtype == x4.dtype
    assert jnp.allclose(y4, ref4), "mismatch vs reference clamp (ragged)"

    print("KERNEL_OK")
</pallas_src>

<mosaic_0001>
module attributes {stable_mosaic.version = 11 : i64} {
  func.func @_relumax_kernel(%arg0: i32, %arg1: memref<256x1024xf32, #tpu.memory_space<vmem>>, %arg2: memref<256x1024xf32, #tpu.memory_space<vmem>>) attributes {dimension_semantics = [#tpu.dimension_semantics<parallel>], iteration_bounds = array<i64: 1>, scalar_prefetch = 0 : i64, scratch_operands = 0 : i64, tpu.core_type = #tpu.core_type<tc>, window_params = [{transform_indices = @transform_0, window_bounds = array<i64: 256, 1024>}, {transform_indices = @transform_1, window_bounds = array<i64: 256, 1024>}]} {
    %c0 = arith.constant 0 : index
    %c0_0 = arith.constant 0 : index
    %0 = vector.load %arg1[%c0, %c0_0] : memref<256x1024xf32, #tpu.memory_space<vmem>>, vector<256x1024xf32>
    %cst = arith.constant 0.000000e+00 : f32
    %1 = vector.broadcast %cst : f32 to vector<256x1024xf32>
    %2 = arith.maximumf %0, %1 : vector<256x1024xf32>
    %cst_1 = arith.constant 6.000000e+00 : f32
    %3 = vector.broadcast %cst_1 : f32 to vector<256x1024xf32>
    %4 = arith.minimumf %2, %3 : vector<256x1024xf32>
    %c0_2 = arith.constant 0 : index
    %c0_3 = arith.constant 0 : index
    %5 = vector.load %arg2[%c0_2, %c0_3] : memref<256x1024xf32, #tpu.memory_space<vmem>>, vector<256x1024xf32>
    tpu.vector_store %arg2[%c0_2, %c0_3], %4 {strides = array<i32>} : memref<256x1024xf32, #tpu.memory_space<vmem>>, vector<256x1024xf32>,
    return
  }
  func.func @transform_0(%arg0: i32) -> (i32, i32) {
    %c0_i32 = arith.constant 0 : i32
    %c0_i32_0 = arith.constant 0 : i32
    return %arg0, %c0_i32 : i32, i32
  }
  func.func @transform_1(%arg0: i32) -> (i32, i32) {
    %c0_i32 = arith.constant 0 : i32
    %c0_i32_0 = arith.constant 0 : i32
    return %arg0, %c0_i32 : i32, i32
  }
}

</mosaic_0001>

<llo_original>
// kernel: tpu_custom_call.1
$region0: #{tpu_custom_call.1}
  #allocation0 [shape = 'u32[]', space=smem, size = 0x4, offset = 0x4, fixed_abs, tag = 'smem constant byte address 0x4 - core index']
  #allocation1 [shape = 'u32[144,128]{1,0:T(1,128)}', space=vmem, size = 0x12000, scoped, tag = 'internal scratch']
  %s0 = inlined_call_operand.hbm [shape: f32[256,1024], index: 0, kind: input, shape index: {}]
  %s1 = inlined_call_operand.hbm [shape: f32[256,1024], index: 1, kind: output, shape index: {}]
  %s2 = sld [smem:[#allocation0]]
  $region18: #{tpu_custom_call.1} parent=0
    _
  %s4 = ssub.s32 1, %s2
  %s5 = scalar_select 0, %s4, %s2
  $region1: #{tpu_custom_call.1} parent=0
    #allocation2 [shape = 'u8[1048576]{0}', space=vmem, size = 0x100000, scoped, tag = 'input window, operand 0, single buffered']
    #allocation3 [shape = 's32[1]{0}', space=sflag, size = 0x4, scoped, tag = 'scoped memory for tpu_custom_call.1']
    #allocation4 [shape = 's32[1]{0}', space=sflag, size = 0x4, scoped, tag = 'scoped memory for tpu_custom_call.1']
    #allocation5 [shape = 'u8[1048576]{0}', space=vmem, size = 0x100000, scoped, tag = 'output window, operand 0, single buffered']
    %6 = vsyncpa [#allocation3], 0
    %7 = vsyncpa [#allocation4], 0
    // Predicated region
    $region2: #{tpu_custom_call.1} parent=1 // pred_check
      _
    $region3: #{tpu_custom_call.1} parent=1 // pred_check_branch
      %9 = sbr.rel (0) target = $region5
    $region4: #{tpu_custom_call.1} parent=1 // pred_region
      %s11 = ssub.s32 32768, 32768
      %12 = vsyncadd [#allocation3], %s11
      %s13 = sshll.u32 [#allocation2], 4
      %s14 = int_to_ptr.vmem [resolvable:$true] %s13
      %19 = dma.hbm_to_vmem [thread:$0]  %s0, 32768, %s14, [#allocation3], 1024, 1024, 64
    $region5: #{tpu_custom_call.1} parent=1 // pred_fallthru
      _
    // Predicated region
    $region6: #{tpu_custom_call.1} parent=1 // pred_check
      _
    $region7: #{tpu_custom_call.1} parent=1 // pred_check_branch
      %21 = sbr.rel (0) target = $region9
    $region8: #{tpu_custom_call.1} parent=1 // pred_region
      %22 = dma.done [#allocation3], 32768
    $region9: #{tpu_custom_call.1} parent=1 // pred_fallthru
      _
    %v23 = vld [vmem:[#allocation2] sm:$0xff]
    %v24 = vld [vmem:[#allocation2 + $0x8] sm:$0xff]
    %v25 = vld [vmem:[#allocation2 + $0x10] sm:$0xff]
    %v26 = vld [vmem:[#allocation2 + $0x18] sm:$0xff]
    %v27 = vld [vmem:[#allocation2 + $0x20] sm:$0xff]
    %v28 = vld [vmem:[#allocation2 + $0x28] sm:$0xff]
    %v29 = vld [vmem:[#allocation2 + $0x30] sm:$0xff]
    %v30 = vld [vmem:[#allocation2 + $0x38] sm:$0xff]
    %v31 = vld [vmem:[#allocation2 + $0x40] sm:$0xff]
    %v32 = vld [vmem:[#allocation2 + $0x48] sm:$0xff]
    %v33 = vld [vmem:[#allocation2 + $0x50] sm:$0xff]
    %v34 = vld [vmem:[#allocation2 + $0x58] sm:$0xff]
    %v35 = vld [vmem:[#allocation2 + $0x60] sm:$0xff]
    %v36 = vld [vmem:[#allocation2 + $0x68] sm:$0xff]
    %v37 = vld [vmem:[#allocation2 + $0x70] sm:$0xff]
    %v38 = vld [vmem:[#allocation2 + $0x78] sm:$0xff]
    %v39 = vld [vmem:[#allocation2 + $0x80] sm:$0xff]
    %v40 = vld [vmem:[#allocation2 + $0x88] sm:$0xff]
    %v41 = vld [vmem:[#allocation2 + $0x90] sm:$0xff]
    %v42 = vld [vmem:[#allocation2 + $0x98] sm:$0xff]
    %v43 = vld [vmem:[#allocation2 + $0xa0] sm:$0xff]
    %v44 = vld [vmem:[#allocation2 + $0xa8] sm:$0xff]
    %v45 = vld [vmem:[#allocation2 + $0xb0] sm:$0xff]
    %v46 = vld [vmem:[#allocation2 + $0xb8] sm:$0xff]
    %v47 = vld [vmem:[#allocation2 + $0xc0] sm:$0xff]
    %v48 = vld [vmem:[#allocation2 + $0xc8] sm:$0xff]
    %v49 = vld [vmem:[#allocation2 + $0xd0] sm:$0xff]
    %v50 = vld [vmem:[#allocation2 + $0xd8] sm:$0xff]
    %v51 = vld [vmem:[#allocation2 + $0xe0] sm:$0xff]
    %v52 = vld [vmem:[#allocation2 + $0xe8] sm:$0xff]
    %v53 = vld [vmem:[#allocation2 + $0xf0] sm:$0xff]
    %v54 = vld [vmem:[#allocation2 + $0xf8] sm:$0xff]
    %v55 = vld [vmem:[#allocation2 + $0x100] sm:$0xff]
    %v56 = vld [vmem:[#allocation2 + $0x108] sm:$0xff]
    %v57 = vld [vmem:[#allocation2 + $0x110] sm:$0xff]
    %v58 = vld [vmem:[#allocation2 + $0x118] sm:$0xff]
    %v59 = vld [vmem:[#allocation2 + $0x120] sm:$0xff]
    %v60 = vld [vmem:[#allocation2 + $0x128] sm:$0xff]
    %v61 = vld [vmem:[#allocation2 + $0x130] sm:$0xff]
    %v62 = vld [vmem:[#allocation2 + $0x138] sm:$0xff]
    %v63 = vld [vmem:[#allocation2 + $0x140] sm:$0xff]
    %v64 = vld [vmem:[#allocation2 + $0x148] sm:$0xff]
    %v65 = vld [vmem:[#allocation2 + $0x150] sm:$0xff]
    %v66 = vld [vmem:[#allocation2 + $0x158] sm:$0xff]
    %v67 = vld [vmem:[#allocation2 + $0x160] sm:$0xff]
    %v68 = vld [vmem:[#allocation2 + $0x168] sm:$0xff]
    %v69 = vld [vmem:[#allocation2 + $0x170] sm:$0xff]
    %v70 = vld [vmem:[#allocation2 + $0x178] sm:$0xff]
    %v71 = vld [vmem:[#allocation2 + $0x180] sm:$0xff]
    %v72 = vld [vmem:[#allocation2 + $0x188] sm:$0xff]
    %v73 = vld [vmem:[#allocation2 + $0x190] sm:$0xff]
    %v74 = vld [vmem:[#allocation2 + $0x198] sm:$0xff]
    %v75 = vld [vmem:[#allocation2 + $0x1a0] sm:$0xff]
    %v76 = vld [vmem:[#allocation2 + $0x1a8] sm:$0xff]
    %v77 = vld [vmem:[#allocation2 + $0x1b0] sm:$0xff]
    %v78 = vld [vmem:[#allocation2 + $0x1b8] sm:$0xff]
    %v79 = vld [vmem:[#allocation2 + $0x1c0] sm:$0xff]
    %v80 = vld [vmem:[#allocation2 + $0x1c8] sm:$0xff]
    %v81 = vld [vmem:[#allocation2 + $0x1d0] sm:$0xff]
    %v82 = vld [vmem:[#allocation2 + $0x1d8] sm:$0xff]
    %v83 = vld [vmem:[#allocation2 + $0x1e0] sm:$0xff]
    %v84 = vld [vmem:[#allocation2 + $0x1e8] sm:$0xff]
    %v85 = vld [vmem:[#allocation2 + $0x1f0] sm:$0xff]
    %v86 = vld [vmem:[#allocation2 + $0x1f8] sm:$0xff]
    %v87 = vld [vmem:[#allocation2 + $0x200] sm:$0xff]
    %v88 = vld [vmem:[#allocation2 + $0x208] sm:$0xff]
    %v89 = vld [vmem:[#allocation2 + $0x210] sm:$0xff]
    %v90 = vld [vmem:[#allocation2 + $0x218] sm:$0xff]
    %v91 = vld [vmem:[#allocation2 + $0x220] sm:$0xff]
    %v92 = vld [vmem:[#allocation2 + $0x228] sm:$0xff]
    %v93 = vld [vmem:[#allocation2 + $0x230] sm:$0xff]
    %v94 = vld [vmem:[#allocation2 + $0x238] sm:$0xff]
    %v95 = vld [vmem:[#allocation2 + $0x240] sm:$0xff]
    %v96 = vld [vmem:[#allocation2 + $0x248] sm:$0xff]
    %v97 = vld [vmem:[#allocation2 + $0x250] sm:$0xff]
    %v98 = vld [vmem:[#allocation2 + $0x258] sm:$0xff]
    %v99 = vld [vmem:[#allocation2 + $0x260] sm:$0xff]
    %v100 = vld [vmem:[#allocation2 + $0x268] sm:$0xff]
    %v101 = vld [vmem:[#allocation2 + $0x270] sm:$0xff]
    %v102 = vld [vmem:[#allocation2 + $0x278] sm:$0xff]
    %v103 = vld [vmem:[#allocation2 + $0x280] sm:$0xff]
    %v104 = vld [vmem:[#allocation2 + $0x288] sm:$0xff]
    %v105 = vld [vmem:[#allocation2 + $0x290] sm:$0xff]
    %v106 = vld [vmem:[#allocation2 + $0x298] sm:$0xff]
    %v107 = vld [vmem:[#allocation2 + $0x2a0] sm:$0xff]
    %v108 = vld [vmem:[#allocation2 + $0x2a8] sm:$0xff]
    %v109 = vld [vmem:[#allocation2 + $0x2b0] sm:$0xff]
    %v110 = vld [vmem:[#allocation2 + $0x2b8] sm:$0xff]
    %v111 = vld [vmem:[#allocation2 + $0x2c0] sm:$0xff]
    %v112 = vld [vmem:[#allocation2 + $0x2c8] sm:$0xff]
    %v113 = vld [vmem:[#allocation2 + $0x2d0] sm:$0xff]
    %v114 = vld [vmem:[#allocation2 + $0x2d8] sm:$0xff]
    %v115 = vld [vmem:[#allocation2 + $0x2e0] sm:$0xff]
    %v116 = vld [vmem:[#allocation2 + $0x2e8] sm:$0xff]
    %v117 = vld [vmem:[#allocation2 + $0x2f0] sm:$0xff]
    %v118 = vld [vmem:[#allocation2 + $0x2f8] sm:$0xff]
    %v119 = vld [vmem:[#allocation2 + $0x300] sm:$0xff]
    %v120 = vld [vmem:[#allocation2 + $0x308] sm:$0xff]
    %v121 = vld [vmem:[#allocation2 + $0x310] sm:$0xff]
    %v122 = vld [vmem:[#allocation2 + $0x318] sm:$0xff]
    %v123 = vld [vmem:[#allocation2 + $0x320] sm:$0xff]
    %v124 = vld [vmem:[#allocation2 + $0x328] sm:$0xff]
    %v125 = vld [vmem:[#allocation2 + $0x330] sm:$0xff]
    %v126 = vld [vmem:[#allocation2 + $0x338] sm:$0xff]
    %v127 = vld [vmem:[#allocation2 + $0x340] sm:$0xff]
    %v128 = vld [vmem:[#allocation2 + $0x348] sm:$0xff]
    %v129 = vld [vmem:[#allocation2 + $0x350] sm:$0xff]
    %v130 = vld [vmem:[#allocation2 + $0x358] sm:$0xff]
    %v131 = vld [vmem:[#allocation2 + $0x360] sm:$0xff]
    %v132 = vld [vmem:[#allocation2 + $0x368] sm:$0xff]
    %v133 = vld [vmem:[#allocation2 + $0x370] sm:$0xff]
    %v134 = vld [vmem:[#allocation2 + $0x378] sm:$0xff]
    %v135 = vld [vmem:[#allocation2 + $0x380] sm:$0xff]
    %v136 = vld [vmem:[#allocation2 + $0x388] sm:$0xff]
    %v137 = vld [vmem:[#allocation2 + $0x390] sm:$0xff]
    %v138 = vld [vmem:[#allocation2 + $0x398] sm:$0xff]
    %v139 = vld [vmem:[#allocation2 + $0x3a0] sm:$0xff]
    %v140 = vld [vmem:[#allocation2 + $0x3a8] sm:$0xff]
    %v141 = vld [vmem:[#allocation2 + $0x3b0] sm:$0xff]
    %v142 = vld [vmem:[#allocation2 + $0x3b8] sm:$0xff]
    %v143 = vld [vmem:[#allocation2 + $0x3c0] sm:$0xff]
    %v144 = vld [vmem:[#allocation2 + $0x3c8] sm:$0xff]
    %v145 = vld [vmem:[#allocation2 + $0x3d0] sm:$0xff]
    %v146 = vld [vmem:[#allocation2 + $0x3d8] sm:$0xff]
    %v147 = vld [vmem:[#allocation2 + $0x3e0] sm:$0xff]
    %v148 = vld [vmem:[#allocation2 + $0x3e8] sm:$0xff]
    %v149 = vld [vmem:[#allocation2 + $0x3f0] sm:$0xff]
    %v150 = vld [vmem:[#allocation2 + $0x3f8] sm:$0xff]
    %v151 = vld [vmem:[#allocation2 + $0x400] sm:$0xff]
    %v152 = vld [vmem:[#allocation2 + $0x408] sm:$0xff]
    %v153 = vld [vmem:[#allocation2 + $0x410] sm:$0xff]
    %v154 = vld [vmem:[#allocation2 + $0x418] sm:$0xff]
    %v155 = vld [vmem:[#allocation2 + $0x420] sm:$0xff]
    %v156 = vld [vmem:[#allocation2 + $0x428] sm:$0xff]
    %v157 = vld [vmem:[#allocation2 + $0x430] sm:$0xff]
    %v158 = vld [vmem:[#allocation2 + $0x438] sm:$0xff]
    %v159 = vld [vmem:[#allocation2 + $0x440] sm:$0xff]
    %v160 = vld [vmem:[#allocation2 + $0x448] sm:$0xff]
    %v161 = vld [vmem:[#allocation2 + $0x450] sm:$0xff]
    %v162 = vld [vmem:[#allocation2 + $0x458] sm:$0xff]
    %v163 = vld [vmem:[#allocation2 + $0x460] sm:$0xff]
    %v164 = vld [vmem:[#allocation2 + $0x468] sm:$0xff]
    %v165 = vld [vmem:[#allocation2 + $0x470] sm:$0xff]
    %v166 = vld [vmem:[#allocation2 + $0x478] sm:$0xff]
    %v167 = vld [vmem:[#allocation2 + $0x480] sm:$0xff]
    %v168 = vld [vmem:[#allocation2 + $0x488] sm:$0xff]
    %v169 = vld [vmem:[#allocation2 + $0x490] sm:$0xff]
    %v170 = vld [vmem:[#allocation2 + $0x498] sm:$0xff]
    %v171 = vld [vmem:[#allocation2 + $0x4a0] sm:$0xff]
    %v172 = vld [vmem:[#allocation2 + $0x4a8] sm:$0xff]
    %v173 = vld [vmem:[#allocation2 + $0x4b0] sm:$0xff]
    %v174 = vld [vmem:[#allocation2 + $0x4b8] sm:$0xff]
    %v175 = vld [vmem:[#allocation2 + $0x4c0] sm:$0xff]
    %v176 = vld [vmem:[#allocation2 + $0x4c8] sm:$0xff]
    %v177 = vld [vmem:[#allocation2 + $0x4d0] sm:$0xff]
    %v178 = vld [vmem:[#allocation2 + $0x4d8] sm:$0xff]
    %v179 = vld [vmem:[#allocation2 + $0x4e0] sm:$0xff]
    %v180 = vld [vmem:[#allocation2 + $0x4e8] sm:$0xff]
    %v181 = vld [vmem:[#allocation2 + $0x4f0] sm:$0xff]
    %v182 = vld [vmem:[#allocation2 + $0x4f8] sm:$0xff]
    %v183 = vld [vmem:[#allocation2 + $0x500] sm:$0xff]
    %v184 = vld [vmem:[#allocation2 + $0x508] sm:$0xff]
    %v185 = vld [vmem:[#allocation2 + $0x510] sm:$0xff]
    %v186 = vld [vmem:[#allocation2 + $0x518] sm:$0xff]
    %v187 = vld [vmem:[#allocation2 + $0x520] sm:$0xff]
    %v188 = vld [vmem:[#allocation2 + $0x528] sm:$0xff]
    %v189 = vld [vmem:[#allocation2 + $0x530] sm:$0xff]
    %v190 = vld [vmem:[#allocation2 + $0x538] sm:$0xff]
    %v191 = vld [vmem:[#allocation2 + $0x540] sm:$0xff]
    %v192 = vld [vmem:[#allocation2 + $0x548] sm:$0xff]
    %v193 = vld [vmem:[#allocation2 + $0x550] sm:$0xff]
    %v194 = vld [vmem:[#allocation2 + $0x558] sm:$0xff]
    %v195 = vld [vmem:[#allocation2 + $0x560] sm:$0xff]
    %v196 = vld [vmem:[#allocation2 + $0x568] sm:$0xff]
    %v197 = vld [vmem:[#allocation2 + $0x570] sm:$0xff]
    %v198 = vld [vmem:[#allocation2 + $0x578] sm:$0xff]
    %v199 = vld [vmem:[#allocation2 + $0x580] sm:$0xff]
    %v200 = vld [vmem:[#allocation2 + $0x588] sm:$0xff]
    %v201 = vld [vmem:[#allocation2 + $0x590] sm:$0xff]
    %v202 = vld [vmem:[#allocation2 + $0x598] sm:$0xff]
    %v203 = vld [vmem:[#allocation2 + $0x5a0] sm:$0xff]
    %v204 = vld [vmem:[#allocation2 + $0x5a8] sm:$0xff]
    %v205 = vld [vmem:[#allocation2 + $0x5b0] sm:$0xff]
    %v206 = vld [vmem:[#allocation2 + $0x5b8] sm:$0xff]
    %v207 = vld [vmem:[#allocation2 + $0x5c0] sm:$0xff]
    %v208 = vld [vmem:[#allocation2 + $0x5c8] sm:$0xff]
    %v209 = vld [vmem:[#allocation2 + $0x5d0] sm:$0xff]
    %v210 = vld [vmem:[#allocation2 + $0x5d8] sm:$0xff]
    %v211 = vld [vmem:[#allocation2 + $0x5e0] sm:$0xff]
    %v212 = vld [vmem:[#allocation2 + $0x5e8] sm:$0xff]
    %v213 = vld [vmem:[#allocation2 + $0x5f0] sm:$0xff]
    %v214 = vld [vmem:[#allocation2 + $0x5f8] sm:$0xff]
    %v215 = vld [vmem:[#allocation2 + $0x600] sm:$0xff]
    %v216 = vld [vmem:[#allocation2 + $0x608] sm:$0xff]
    %v217 = vld [vmem:[#allocation2 + $0x610] sm:$0xff]
    %v218 = vld [vmem:[#allocation2 + $0x618] sm:$0xff]
    %v219 = vld [vmem:[#allocation2 + $0x620] sm:$0xff]
    %v220 = vld [vmem:[#allocation2 + $0x628] sm:$0xff]
    %v221 = vld [vmem:[#allocation2 + $0x630] sm:$0xff]
    %v222 = vld [vmem:[#allocation2 + $0x638] sm:$0xff]
    %v223 = vld [vmem:[#allocation2 + $0x640] sm:$0xff]
    %v224 = vld [vmem:[#allocation2 + $0x648] sm:$0xff]
    %v225 = vld [vmem:[#allocation2 + $0x650] sm:$0xff]
    %v226 = vld [vmem:[#allocation2 + $0x658] sm:$0xff]
    %v227 = vld [vmem:[#allocation2 + $0x660] sm:$0xff]
    %v228 = vld [vmem:[#allocation2 + $0x668] sm:$0xff]
    %v229 = vld [vmem:[#allocation2 + $0x670] sm:$0xff]
    %v230 = vld [vmem:[#allocation2 + $0x678] sm:$0xff]
    %v231 = vld [vmem:[#allocation2 + $0x680] sm:$0xff]
    %v232 = vld [vmem:[#allocation2 + $0x688] sm:$0xff]
    %v233 = vld [vmem:[#allocation2 + $0x690] sm:$0xff]
    %v234 = vld [vmem:[#allocation2 + $0x698] sm:$0xff]
    %v235 = vld [vmem:[#allocation2 + $0x6a0] sm:$0xff]
    %v236 = vld [vmem:[#allocation2 + $0x6a8] sm:$0xff]
    %v237 = vld [vmem:[#allocation2 + $0x6b0] sm:$0xff]
    %v238 = vld [vmem:[#allocation2 + $0x6b8] sm:$0xff]
    %v239 = vld [vmem:[#allocation2 + $0x6c0] sm:$0xff]
    %v240 = vld [vmem:[#allocation2 + $0x6c8] sm:$0xff]
    %v241 = vld [vmem:[#allocation2 + $0x6d0] sm:$0xff]
    %v242 = vld [vmem:[#allocation2 + $0x6d8] sm:$0xff]
    %v243 = vld [vmem:[#allocation2 + $0x6e0] sm:$0xff]
    %v244 = vld [vmem:[#allocation2 + $0x6e8] sm:$0xff]
    %v245 = vld [vmem:[#allocation2 + $0x6f0] sm:$0xff]
    %v246 = vld [vmem:[#allocation2 + $0x6f8] sm:$0xff]
    %v247 = vld [vmem:[#allocation2 + $0x700] sm:$0xff]
    %v248 = vld [vmem:[#allocation2 + $0x708] sm:$0xff]
    %v249 = vld [vmem:[#allocation2 + $0x710] sm:$0xff]
    %v250 = vld [vmem:[#allocation2 + $0x718] sm:$0xff]
    %v251 = vld [vmem:[#allocation2 + $0x720] sm:$0xff]
    %v252 = vld [vmem:[#allocation2 + $0x728] sm:$0xff]
    %v253 = vld [vmem:[#allocation2 + $0x730] sm:$0xff]
    %v254 = vld [vmem:[#allocation2 + $0x738] sm:$0xff]
    %v255 = vld [vmem:[#allocation2 + $0x740] sm:$0xff]
    %v256 = vld [vmem:[#allocation2 + $0x748] sm:$0xff]
    %v257 = vld [vmem:[#allocation2 + $0x750] sm:$0xff]
    %v258 = vld [vmem:[#allocation2 + $0x758] sm:$0xff]
    %v259 = vld [vmem:[#allocation2 + $0x760] sm:$0xff]
    %v260 = vld [vmem:[#allocation2 + $0x768] sm:$0xff]
    %v261 = vld [vmem:[#allocation2 + $0x770] sm:$0xff]
    %v262 = vld [vmem:[#allocation2 + $0x778] sm:$0xff]
    %v263 = vld [vmem:[#allocation2 + $0x780] sm:$0xff]
    %v264 = vld [vmem:[#allocation2 + $0x788] sm:$0xff]
    %v265 = vld [vmem:[#allocation2 + $0x790] sm:$0xff]
    %v266 = vld [vmem:[#allocation2 + $0x798] sm:$0xff]
    %v267 = vld [vmem:[#allocation2 + $0x7a0] sm:$0xff]
    %v268 = vld [vmem:[#allocation2 + $0x7a8] sm:$0xff]
    %v269 = vld [vmem:[#allocation2 + $0x7b0] sm:$0xff]
    %v270 = vld [vmem:[#allocation2 + $0x7b8] sm:$0xff]
    %v271 = vld [vmem:[#allocation2 + $0x7c0] sm:$0xff]
    %v272 = vld [vmem:[#allocation2 + $0x7c8] sm:$0xff]
    %v273 = vld [vmem:[#allocation2 + $0x7d0] sm:$0xff]
    %v274 = vld [vmem:[#allocation2 + $0x7d8] sm:$0xff]
    %v275 = vld [vmem:[#allocation2 + $0x7e0] sm:$0xff]
    %v276 = vld [vmem:[#allocation2 + $0x7e8] sm:$0xff]
    %v277 = vld [vmem:[#allocation2 + $0x7f0] sm:$0xff]
    %v278 = vld [vmem:[#allocation2 + $0x7f8] sm:$0xff]
    %v279 = vmax.f32 %v23, 0.0
    %v280 = vmax.f32 %v24, 0.0
    %v281 = vmax.f32 %v25, 0.0
    %v282 = vmax.f32 %v26, 0.0
    %v283 = vmax.f32 %v27, 0.0
    %v284 = vmax.f32 %v28, 0.0
    %v285 = vmax.f32 %v29, 0.0
    %v286 = vmax.f32 %v30, 0.0
    %v287 = vmax.f32 %v31, 0.0
    %v288 = vmax.f32 %v32, 0.0
    %v289 = vmax.f32 %v33, 0.0
    %v290 = vmax.f32 %v34, 0.0
    %v291 = vmax.f32 %v35, 0.0
    %v292 = vmax.f32 %v36, 0.0
    %v293 = vmax.f32 %v37, 0.0
    %v294 = vmax.f32 %v38, 0.0
    %v295 = vmax.f32 %v39, 0.0
    %v296 = vmax.f32 %v40, 0.0
    %v297 = vmax.f32 %v41, 0.0
    %v298 = vmax.f32 %v42, 0.0
    %v299 = vmax.f32 %v43, 0.0
    %v300 = vmax.f32 %v44, 0.0
    %v301 = vmax.f32 %v45, 0.0
    %v302 = vmax.f32 %v46, 0.0
    %v303 = vmax.f32 %v47, 0.0
    %v304 = vmax.f32 %v48, 0.0
    %v305 = vmax.f32 %v49, 0.0
    %v306 = vmax.f32 %v50, 0.0
    %v307 = vmax.f32 %v51, 0.0
    %v308 = vmax.f32 %v52, 0.0
    %v309 = vmax.f32 %v53, 0.0
    %v310 = vmax.f32 %v54, 0.0
    %v311 = vmax.f32 %v55, 0.0
    %v312 = vmax.f32 %v56, 0.0
    %v313 = vmax.f32 %v57, 0.0
    %v314 = vmax.f32 %v58, 0.0
    %v315 = vmax.f32 %v59, 0.0
    %v316 = vmax.f32 %v60, 0.0
    %v317 = vmax.f32 %v61, 0.0
    %v318 = vmax.f32 %v62, 0.0
    %v319 = vmax.f32 %v63, 0.0
    %v320 = vmax.f32 %v64, 0.0
    %v321 = vmax.f32 %v65, 0.0
    %v322 = vmax.f32 %v66, 0.0
    %v323 = vmax.f32 %v67, 0.0
    %v324 = vmax.f32 %v68, 0.0
    %v325 = vmax.f32 %v69, 0.0
    %v326 = vmax.f32 %v70, 0.0
    %v327 = vmax.f32 %v71, 0.0
    %v328 = vmax.f32 %v72, 0.0
    %v329 = vmax.f32 %v73, 0.0
    %v330 = vmax.f32 %v74, 0.0
    %v331 = vmax.f32 %v75, 0.0
    %v332 = vmax.f32 %v76, 0.0
    %v333 = vmax.f32 %v77, 0.0
    %v334 = vmax.f32 %v78, 0.0
    %v335 = vmax.f32 %v79, 0.0
    %v336 = vmax.f32 %v80, 0.0
    %v337 = vmax.f32 %v81, 0.0
    %v338 = vmax.f32 %v82, 0.0
    %v339 = vmax.f32 %v83, 0.0
    %v340 = vmax.f32 %v84, 0.0
    %v341 = vmax.f32 %v85, 0.0
    %v342 = vmax.f32 %v86, 0.0
    %v343 = vmax.f32 %v87, 0.0
    %v344 = vmax.f32 %v88, 0.0
    %v345 = vmax.f32 %v89, 0.0
    %v346 = vmax.f32 %v90, 0.0
    %v347 = vmax.f32 %v91, 0.0
    %v348 = vmax.f32 %v92, 0.0
    %v349 = vmax.f32 %v93, 0.0
    %v350 = vmax.f32 %v94, 0.0
    %v351 = vmax.f32 %v95, 0.0
    %v352 = vmax.f32 %v96, 0.0
    %v353 = vmax.f32 %v97, 0.0
    %v354 = vmax.f32 %v98, 0.0
    %v355 = vmax.f32 %v99, 0.0
    %v356 = vmax.f32 %v100, 0.0
    %v357 = vmax.f32 %v101, 0.0
    %v358 = vmax.f32 %v102, 0.0
    %v359 = vmax.f32 %v103, 0.0
    %v360 = vmax.f32 %v104, 0.0
    %v361 = vmax.f32 %v105, 0.0
    %v362 = vmax.f32 %v106, 0.0
    %v363 = vmax.f32 %v107, 0.0
    %v364 = vmax.f32 %v108, 0.0
    %v365 = vmax.f32 %v109, 0.0
    %v366 = vmax.f32 %v110, 0.0
    %v367 = vmax.f32 %v111, 0.0
    %v368 = vmax.f32 %v112, 0.0
    %v369 = vmax.f32 %v113, 0.0
    %v370 = vmax.f32 %v114, 0.0
    %v371 = vmax.f32 %v115, 0.0
    %v372 = vmax.f32 %v116, 0.0
    %v373 = vmax.f32 %v117, 0.0
    %v374 = vmax.f32 %v118, 0.0
    %v375 = vmax.f32 %v119, 0.0
    %v376 = vmax.f32 %v120, 0.0
    %v377 = vmax.f32 %v121, 0.0
    %v378 = vmax.f32 %v122, 0.0
    %v379 = vmax.f32 %v123, 0.0
    %v380 = vmax.f32 %v124, 0.0
    %v381 = vmax.f32 %v125, 0.0
    %v382 = vmax.f32 %v126, 0.0
    %v383 = vmax.f32 %v127, 0.0
    %v384 = vmax.f32 %v128, 0.0
    %v385 = vmax.f32 %v129, 0.0
    %v386 = vmax.f32 %v130, 0.0
    %v387 = vmax.f32 %v131, 0.0
    %v388 = vmax.f32 %v132, 0.0
    %v389 = vmax.f32 %v133, 0.0
    %v390 = vmax.f32 %v134, 0.0
    %v391 = vmax.f32 %v135, 0.0
    %v392 = vmax.f32 %v136, 0.0
    %v393 = vmax.f32 %v137, 0.0
    %v394 = vmax.f32 %v138, 0.0
    %v395 = vmax.f32 %v139, 0.0
    %v396 = vmax.f32 %v140, 0.0
    %v397 = vmax.f32 %v141, 0.0
    %v398 = vmax.f32 %v142, 0.0
    %v399 = vmax.f32 %v143, 0.0
    %v400 = vmax.f32 %v144, 0.0
    %v401 = vmax.f32 %v145, 0.0
    %v402 = vmax.f32 %v146, 0.0
    %v403 = vmax.f32 %v147, 0.0
    %v404 = vmax.f32 %v148, 0.0
    %v405 = vmax.f32 %v149, 0.0
    %v406 = vmax.f32 %v150, 0.0
    %v407 = vmax.f32 %v151, 0.0
    %v408 = vmax.f32 %v152, 0.0
    %v409 = vmax.f32 %v153, 0.0
    %v410 = vmax.f32 %v154, 0.0
    %v411 = vmax.f32 %v155, 0.0
    %v412 = vmax.f32 %v156, 0.0
    %v413 = vmax.f32 %v157, 0.0
    %v414 = vmax.f32 %v158, 0.0
    %v415 = vmax.f32 %v159, 0.0
    %v416 = vmax.f32 %v160, 0.0
    %v417 = vmax.f32 %v161, 0.0
    %v418 = vmax.f32 %v162, 0.0
    %v419 = vmax.f32 %v163, 0.0
    %v420 = vmax.f32 %v164, 0.0
    %v421 = vmax.f32 %v165, 0.0
    %v422 = vmax.f32 %v166, 0.0
    %v423 = vmax.f32 %v167, 0.0
    %v424 = vmax.f32 %v168, 0.0
    %v425 = vmax.f32 %v169, 0.0
    %v426 = vmax.f32 %v170, 0.0
    %v427 = vmax.f32 %v171, 0.0
    %v428 = vmax.f32 %v172, 0.0
    %v429 = vmax.f32 %v173, 0.0
    %v430 = vmax.f32 %v174, 0.0
    %v431 = vmax.f32 %v175, 0.0
    %v432 = vmax.f32 %v176, 0.0
    %v433 = vmax.f32 %v177, 0.0
    %v434 = vmax.f32 %v178, 0.0
    %v435 = vmax.f32 %v179, 0.0
    %v436 = vmax.f32 %v180, 0.0
    %v437 = vmax.f32 %v181, 0.0
    %v438 = vmax.f32 %v182, 0.0
    %v439 = vmax.f32 %v183, 0.0
    %v440 = vmax.f32 %v184, 0.0
    %v441 = vmax.f32 %v185, 0.0
    %v442 = vmax.f32 %v186, 0.0
    %v443 = vmax.f32 %v187, 0.0
    %v444 = vmax.f32 %v188, 0.0
    %v445 = vmax.f32 %v189, 0.0
    %v446 = vmax.f32 %v190, 0.0
    %v447 = vmax.f32 %v191, 0.0
    %v448 = vmax.f32 %v192, 0.0
    %v449 = vmax.f32 %v193, 0.0
    %v450 = vmax.f32 %v194, 0.0
    %v451 = vmax.f32 %v195, 0.0
    %v452 = vmax.f32 %v196, 0.0
    %v453 = vmax.f32 %v197, 0.0
    %v454 = vmax.f32 %v198, 0.0
    %v455 = vmax.f32 %v199, 0.0
    %v456 = vmax.f32 %v200, 0.0
    %v457 = vmax.f32 %v201, 0.0
    %v458 = vmax.f32 %v202, 0.0
    %v459 = vmax.f32 %v203, 0.0
    %v460 = vmax.f32 %v204, 0.0
    %v461 = vmax.f32 %v205, 0.0
    %v462 = vmax.f32 %v206, 0.0
    %v463 = vmax.f32 %v207, 0.0
    %v464 = vmax.f32 %v208, 0.0
    %v465 = vmax.f32 %v209, 0.0
    %v466 = vmax.f32 %v210, 0.0
    %v467 = vmax.f32 %v211, 0.0
    %v468 = vmax.f32 %v212, 0.0
    %v469 = vmax.f32 %v213, 0.0
    %v470 = vmax.f32 %v214, 0.0
    %v471 = vmax.f32 %v215, 0.0
    %v472 = vmax.f32 %v216, 0.0
    %v473 = vmax.f32 %v217, 0.0
    %v474 = vmax.f32 %v218, 0.0
    %v475 = vmax.f32 %v219, 0.0
    %v476 = vmax.f32 %v220, 0.0
    %v477 = vmax.f32 %v221, 0.0
    %v478 = vmax.f32 %v222, 0.0
    %v479 = vmax.f32 %v223, 0.0
    %v480 = vmax.f32 %v224, 0.0
    %v481 = vmax.f32 %v225, 0.0
    %v482 = vmax.f32 %v226, 0.0
    %v483 = vmax.f32 %v227, 0.0
    %v484 = vmax.f32 %v228, 0.0
    %v485 = vmax.f32 %v229, 0.0
    %v486 = vmax.f32 %v230, 0.0
    %v487 = vmax.f32 %v231, 0.0
    %v488 = vmax.f32 %v232, 0.0
    %v489 = vmax.f32 %v233, 0.0
    %v490 = vmax.f32 %v234, 0.0
    %v491 = vmax.f32 %v235, 0.0
    %v492 = vmax.f32 %v236, 0.0
    %v493 = vmax.f32 %v237, 0.0
    %v494 = vmax.f32 %v238, 0.0
    %v495 = vmax.f32 %v239, 0.0
    %v496 = vmax.f32 %v240, 0.0
    %v497 = vmax.f32 %v241, 0.0
    %v498 = vmax.f32 %v242, 0.0
    %v499 = vmax.f32 %v243, 0.0
    %v500 = vmax.f32 %v244, 0.0
    %v501 = vmax.f32 %v245, 0.0
    %v502 = vmax.f32 %v246, 0.0
    %v503 = vmax.f32 %v247, 0.0
    %v504 = vmax.f32 %v248, 0.0
    %v505 = vmax.f32 %v249, 0.0
    %v506 = vmax.f32 %v250, 0.0
    %v507 = vmax.f32 %v251, 0.0
    %v508 = vmax.f32 %v252, 0.0
    %v509 = vmax.f32 %v253, 0.0
    %v510 = vmax.f32 %v254, 0.0
    %v511 = vmax.f32 %v255, 0.0
    %v512 = vmax.f32 %v256, 0.0
    %v513 = vmax.f32 %v257, 0.0
    %v514 = vmax.f32 %v258, 0.0
    %v515 = vmax.f32 %v259, 0.0
    %v516 = vmax.f32 %v260, 0.0
    %v517 = vmax.f32 %v261, 0.0
    %v518 = vmax.f32 %v262, 0.0
    %v519 = vmax.f32 %v263, 0.0
    %v520 = vmax.f32 %v264, 0.0
    %v521 = vmax.f32 %v265, 0.0
    %v522 = vmax.f32 %v266, 0.0
    %v523 = vmax.f32 %v267, 0.0
    %v524 = vmax.f32 %v268, 0.0
    %v525 = vmax.f32 %v269, 0.0
    %v526 = vmax.f32 %v270, 0.0
    %v527 = vmax.f32 %v271, 0.0
    %v528 = vmax.f32 %v272, 0.0
    %v529 = vmax.f32 %v273, 0.0
    %v530 = vmax.f32 %v274, 0.0
    %v531 = vmax.f32 %v275, 0.0
    %v532 = vmax.f32 %v276, 0.0
    %v533 = vmax.f32 %v277, 0.0
    %v534 = vmax.f32 %v278, 0.0
    %v535 = vmin.f32 %v279, 6.0
    %v536 = vmin.f32 %v280, 6.0
    %v537 = vmin.f32 %v281, 6.0
    %v538 = vmin.f32 %v282, 6.0
    %v539 = vmin.f32 %v283, 6.0
    %v540 = vmin.f32 %v284, 6.0
    %v541 = vmin.f32 %v285, 6.0
    %v542 = vmin.f32 %v286, 6.0
    %v543 = vmin.f32 %v287, 6.0
    %v544 = vmin.f32 %v288, 6.0
    %v545 = vmin.f32 %v289, 6.0
    %v546 = vmin.f32 %v290, 6.0
    %v547 = vmin.f32 %v291, 6.0
    %v548 = vmin.f32 %v292, 6.0
    %v549 = vmin.f32 %v293, 6.0
    %v550 = vmin.f32 %v294, 6.0
    %v551 = vmin.f32 %v295, 6.0
    %v552 = vmin.f32 %v296, 6.0
    %v553 = vmin.f32 %v297, 6.0
    %v554 = vmin.f32 %v298, 6.0
    %v555 = vmin.f32 %v299, 6.0
    %v556 = vmin.f32 %v300, 6.0
    %v557 = vmin.f32 %v301, 6.0
    %v558 = vmin.f32 %v302, 6.0
    %v559 = vmin.f32 %v303, 6.0
    %v560 = vmin.f32 %v304, 6.0
    %v561 = vmin.f32 %v305, 6.0
    %v562 = vmin.f32 %v306, 6.0
    %v563 = vmin.f32 %v307, 6.0
    %v564 = vmin.f32 %v308, 6.0
    %v565 = vmin.f32 %v309, 6.0
    %v566 = vmin.f32 %v310, 6.0
    %v567 = vmin.f32 %v311, 6.0
    %v568 = vmin.f32 %v312, 6.0
    %v569 = vmin.f32 %v313, 6.0
    %v570 = vmin.f32 %v314, 6.0
    %v571 = vmin.f32 %v315, 6.0
    %v572 = vmin.f32 %v316, 6.0
    %v573 = vmin.f32 %v317, 6.0
    %v574 = vmin.f32 %v318, 6.0
    %v575 = vmin.f32 %v319, 6.0
    %v576 = vmin.f32 %v320, 6.0
    %v577 = vmin.f32 %v321, 6.0
    %v578 = vmin.f32 %v322, 6.0
    %v579 = vmin.f32 %v323, 6.0
    %v580 = vmin.f32 %v324, 6.0
    %v581 = vmin.f32 %v325, 6.0
    %v582 = vmin.f32 %v326, 6.0
    %v583 = vmin.f32 %v327, 6.0
    %v584 = vmin.f32 %v328, 6.0
    %v585 = vmin.f32 %v329, 6.0
    %v586 = vmin.f32 %v330, 6.0
    %v587 = vmin.f32 %v331, 6.0
    %v588 = vmin.f32 %v332, 6.0
    %v589 = vmin.f32 %v333, 6.0
    %v590 = vmin.f32 %v334, 6.0
    %v591 = vmin.f32 %v335, 6.0
    %v592 = vmin.f32 %v336, 6.0
    %v593 = vmin.f32 %v337, 6.0
    %v594 = vmin.f32 %v338, 6.0
    %v595 = vmin.f32 %v339, 6.0
    %v596 = vmin.f32 %v340, 6.0
    %v597 = vmin.f32 %v341, 6.0
    %v598 = vmin.f32 %v342, 6.0
    %v599 = vmin.f32 %v343, 6.0
    %v600 = vmin.f32 %v344, 6.0
    %v601 = vmin.f32 %v345, 6.0
    %v602 = vmin.f32 %v346, 6.0
    %v603 = vmin.f32 %v347, 6.0
    %v604 = vmin.f32 %v348, 6.0
    %v605 = vmin.f32 %v349, 6.0
    %v606 = vmin.f32 %v350, 6.0
    %v607 = vmin.f32 %v351, 6.0
    %v608 = vmin.f32 %v352, 6.0
    %v609 = vmin.f32 %v353, 6.0
    %v610 = vmin.f32 %v354, 6.0
    %v611 = vmin.f32 %v355, 6.0
    %v612 = vmin.f32 %v356, 6.0
    %v613 = vmin.f32 %v357, 6.0
    %v614 = vmin.f32 %v358, 6.0
    %v615 = vmin.f32 %v359, 6.0
    %v616 = vmin.f32 %v360, 6.0
    %v617 = vmin.f32 %v361, 6.0
    %v618 = vmin.f32 %v362, 6.0
    %v619 = vmin.f32 %v363, 6.0
    %v620 = vmin.f32 %v364, 6.0
    %v621 = vmin.f32 %v365, 6.0
    %v622 = vmin.f32 %v366, 6.0
    %v623 = vmin.f32 %v367, 6.0
    %v624 = vmin.f32 %v368, 6.0
    %v625 = vmin.f32 %v369, 6.0
    %v626 = vmin.f32 %v370, 6.0
    %v627 = vmin.f32 %v371, 6.0
    %v628 = vmin.f32 %v372, 6.0
    %v629 = vmin.f32 %v373, 6.0
    %v630 = vmin.f32 %v374, 6.0
    %v631 = vmin.f32 %v375, 6.0
    %v632 = vmin.f32 %v376, 6.0
    %v633 = vmin.f32 %v377, 6.0
    %v634 = vmin.f32 %v378, 6.0
    %v635 = vmin.f32 %v379, 6.0
    %v636 = vmin.f32 %v380, 6.0
    %v637 = vmin.f32 %v381, 6.0
    %v638 = vmin.f32 %v382, 6.0
    %v639 = vmin.f32 %v383, 6.0
    %v640 = vmin.f32 %v384, 6.0
    %v641 = vmin.f32 %v385, 6.0
    %v642 = vmin.f32 %v386, 6.0
    %v643 = vmin.f32 %v387, 6.0
    %v644 = vmin.f32 %v388, 6.0
    %v645 = vmin.f32 %v389, 6.0
    %v646 = vmin.f32 %v390, 6.0
    %v647 = vmin.f32 %v391, 6.0
    %v648 = vmin.f32 %v392, 6.0
    %v649 = vmin.f32 %v393, 6.0
    %v650 = vmin.f32 %v394, 6.0
    %v651 = vmin.f32 %v395, 6.0
    %v652 = vmin.f32 %v396, 6.0
    %v653 = vmin.f32 %v397, 6.0
    %v654 = vmin.f32 %v398, 6.0
    %v655 = vmin.f32 %v399, 6.0
    %v656 = vmin.f32 %v400, 6.0
    %v657 = vmin.f32 %v401, 6.0
    %v658 = vmin.f32 %v402, 6.0
    %v659 = vmin.f32 %v403, 6.0
    %v660 = vmin.f32 %v404, 6.0
    %v661 = vmin.f32 %v405, 6.0
    %v662 = vmin.f32 %v406, 6.0
    %v663 = vmin.f32 %v407, 6.0
    %v664 = vmin.f32 %v408, 6.0
    %v665 = vmin.f32 %v409, 6.0
    %v666 = vmin.f32 %v410, 6.0
    %v667 = vmin.f32 %v411, 6.0
    %v668 = vmin.f32 %v412, 6.0
    %v669 = vmin.f32 %v413, 6.0
    %v670 = vmin.f32 %v414, 6.0
    %v671 = vmin.f32 %v415, 6.0
    %v672 = vmin.f32 %v416, 6.0
    %v673 = vmin.f32 %v417, 6.0
    %v674 = vmin.f32 %v418, 6.0
    %v675 = vmin.f32 %v419, 6.0
    %v676 = vmin.f32 %v420, 6.0
    %v677 = vmin.f32 %v421, 6.0
    %v678 = vmin.f32 %v422, 6.0
    %v679 = vmin.f32 %v423, 6.0
    %v680 = vmin.f32 %v424, 6.0
    %v681 = vmin.f32 %v425, 6.0
    %v682 = vmin.f32 %v426, 6.0
    %v683 = vmin.f32 %v427, 6.0
    %v684 = vmin.f32 %v428, 6.0
    %v685 = vmin.f32 %v429, 6.0
    %v686 = vmin.f32 %v430, 6.0
    %v687 = vmin.f32 %v431, 6.0
    %v688 = vmin.f32 %v432, 6.0
    %v689 = vmin.f32 %v433, 6.0
    %v690 = vmin.f32 %v434, 6.0
    %v691 = vmin.f32 %v435, 6.0
    %v692 = vmin.f32 %v436, 6.0
    %v693 = vmin.f32 %v437, 6.0
    %v694 = vmin.f32 %v438, 6.0
    %v695 = vmin.f32 %v439, 6.0
    %v696 = vmin.f32 %v440, 6.0
    %v697 = vmin.f32 %v441, 6.0
    %v698 = vmin.f32 %v442, 6.0
    %v699 = vmin.f32 %v443, 6.0
    %v700 = vmin.f32 %v444, 6.0
    %v701 = vmin.f32 %v445, 6.0
    %v702 = vmin.f32 %v446, 6.0
    %v703 = vmin.f32 %v447, 6.0
    %v704 = vmin.f32 %v448, 6.0
    %v705 = vmin.f32 %v449, 6.0
    %v706 = vmin.f32 %v450, 6.0
    %v707 = vmin.f32 %v451, 6.0
    %v708 = vmin.f32 %v452, 6.0
    %v709 = vmin.f32 %v453, 6.0
    %v710 = vmin.f32 %v454, 6.0
    %v711 = vmin.f32 %v455, 6.0
    %v712 = vmin.f32 %v456, 6.0
    %v713 = vmin.f32 %v457, 6.0
    %v714 = vmin.f32 %v458, 6.0
    %v715 = vmin.f32 %v459, 6.0
    %v716 = vmin.f32 %v460, 6.0
    %v717 = vmin.f32 %v461, 6.0
    %v718 = vmin.f32 %v462, 6.0
    %v719 = vmin.f32 %v463, 6.0
    %v720 = vmin.f32 %v464, 6.0
    %v721 = vmin.f32 %v465, 6.0
    %v722 = vmin.f32 %v466, 6.0
    %v723 = vmin.f32 %v467, 6.0
    %v724 = vmin.f32 %v468, 6.0
    %v725 = vmin.f32 %v469, 6.0
    %v726 = vmin.f32 %v470, 6.0
    %v727 = vmin.f32 %v471, 6.0
    %v728 = vmin.f32 %v472, 6.0
    %v729 = vmin.f32 %v473, 6.0
    %v730 = vmin.f32 %v474, 6.0
    %v731 = vmin.f32 %v475, 6.0
    %v732 = vmin.f32 %v476, 6.0
    %v733 = vmin.f32 %v477, 6.0
    %v734 = vmin.f32 %v478, 6.0
    %v735 = vmin.f32 %v479, 6.0
    %v736 = vmin.f32 %v480, 6.0
    %v737 = vmin.f32 %v481, 6.0
    %v738 = vmin.f32 %v482, 6.0
    %v739 = vmin.f32 %v483, 6.0
    %v740 = vmin.f32 %v484, 6.0
    %v741 = vmin.f32 %v485, 6.0
    %v742 = vmin.f32 %v486, 6.0
    %v743 = vmin.f32 %v487, 6.0
    %v744 = vmin.f32 %v488, 6.0
    %v745 = vmin.f32 %v489, 6.0
    %v746 = vmin.f32 %v490, 6.0
    %v747 = vmin.f32 %v491, 6.0
    %v748 = vmin.f32 %v492, 6.0
    %v749 = vmin.f32 %v493, 6.0
    %v750 = vmin.f32 %v494, 6.0
    %v751 = vmin.f32 %v495, 6.0
    %v752 = vmin.f32 %v496, 6.0
    %v753 = vmin.f32 %v497, 6.0
    %v754 = vmin.f32 %v498, 6.0
    %v755 = vmin.f32 %v499, 6.0
    %v756 = vmin.f32 %v500, 6.0
    %v757 = vmin.f32 %v501, 6.0
    %v758 = vmin.f32 %v502, 6.0
    %v759 = vmin.f32 %v503, 6.0
    %v760 = vmin.f32 %v504, 6.0
    %v761 = vmin.f32 %v505, 6.0
    %v762 = vmin.f32 %v506, 6.0
    %v763 = vmin.f32 %v507, 6.0
    %v764 = vmin.f32 %v508, 6.0
    %v765 = vmin.f32 %v509, 6.0
    %v766 = vmin.f32 %v510, 6.0
    %v767 = vmin.f32 %v511, 6.0
    %v768 = vmin.f32 %v512, 6.0
    %v769 = vmin.f32 %v513, 6.0
    %v770 = vmin.f32 %v514, 6.0
    %v771 = vmin.f32 %v515, 6.0
    %v772 = vmin.f32 %v516, 6.0
    %v773 = vmin.f32 %v517, 6.0
    %v774 = vmin.f32 %v518, 6.0
    %v775 = vmin.f32 %v519, 6.0
    %v776 = vmin.f32 %v520, 6.0
    %v777 = vmin.f32 %v521, 6.0
    %v778 = vmin.f32 %v522, 6.0
    %v779 = vmin.f32 %v523, 6.0
    %v780 = vmin.f32 %v524, 6.0
    %v781 = vmin.f32 %v525, 6.0
    %v782 = vmin.f32 %v526, 6.0
    %v783 = vmin.f32 %v527, 6.0
    %v784 = vmin.f32 %v528, 6.0
    %v785 = vmin.f32 %v529, 6.0
    %v786 = vmin.f32 %v530, 6.0
    %v787 = vmin.f32 %v531, 6.0
    %v788 = vmin.f32 %v532, 6.0
    %v789 = vmin.f32 %v533, 6.0
    %v790 = vmin.f32 %v534, 6.0
    %791 = vst [vmem:[#allocation5] sm:$0xff] %v535
    %792 = vst [vmem:[#allocation5 + $0x8] sm:$0xff] %v536
    %793 = vst [vmem:[#allocation5 + $0x10] sm:$0xff] %v537
    %794 = vst [vmem:[#allocation5 + $0x18] sm:$0xff] %v538
    %795 = vst [vmem:[#allocation5 + $0x20] sm:$0xff] %v539
    %796 = vst [vmem:[#allocation5 + $0x28] sm:$0xff] %v540
    %797 = vst [vmem:[#allocation5 + $0x30] sm:$0xff] %v541
    %798 = vst [vmem:[#allocation5 + $0x38] sm:$0xff] %v542
    %799 = vst [vmem:[#allocation5 + $0x40] sm:$0xff] %v543
    %800 = vst [vmem:[#allocation5 + $0x48] sm:$0xff] %v544
    %801 = vst [vmem:[#allocation5 + $0x50] sm:$0xff] %v545
    %802 = vst [vmem:[#allocation5 + $0x58] sm:$0xff] %v546
    %803 = vst [vmem:[#allocation5 + $0x60] sm:$0xff] %v547
    %804 = vst [vmem:[#allocation5 + $0x68] sm:$0xff] %v548
    %805 = vst [vmem:[#allocation5 + $0x70] sm:$0xff] %v549
    %806 = vst [vmem:[#allocation5 + $0x78] sm:$0xff] %v550
    %807 = vst [vmem:[#allocation5 + $0x80] sm:$0xff] %v551
    %808 = vst [vmem:[#allocation5 + $0x88] sm:$0xff] %v552
    %809 = vst [vmem:[#allocation5 + $0x90] sm:$0xff] %v553
    %810 = vst [vmem:[#allocation5 + $0x98] sm:$0xff] %v554
    %811 = vst [vmem:[#allocation5 + $0xa0] sm:$0xff] %v555
    %812 = vst [vmem:[#allocation5 + $0xa8] sm:$0xff] %v556
    %813 = vst [vmem:[#allocation5 + $0xb0] sm:$0xff] %v557
    %814 = vst [vmem:[#allocation5 + $0xb8] sm:$0xff] %v558
    %815 = vst [vmem:[#allocation5 + $0xc0] sm:$0xff] %v559
    %816 = vst [vmem:[#allocation5 + $0xc8] sm:$0xff] %v560
    %817 = vst [vmem:[#allocation5 + $0xd0] sm:$0xff] %v561
    %818 = vst [vmem:[#allocation5 + $0xd8] sm:$0xff] %v562
    %819 = vst [vmem:[#allocation5 + $0xe0] sm:$0xff] %v563
    %820 = vst [vmem:[#allocation5 + $0xe8] sm:$0xff] %v564
    %821 = vst [vmem:[#allocation5 + $0xf0] sm:$0xff] %v565
    %822 = vst [vmem:[#allocation5 + $0xf8] sm:$0xff] %v566
    %823 = vst [vmem:[#allocation5 + $0x100] sm:$0xff] %v567
    %824 = vst [vmem:[#allocation5 + $0x108] sm:$0xff] %v568
    %825 = vst [vmem:[#allocation5 + $0x110] sm:$0xff] %v569
    %826 = vst [vmem:[#allocation5 + $0x118] sm:$0xff] %v570
    %827 = vst [vmem:[#allocation5 + $0x120] sm:$0xff] %v571
    %828 = vst [vmem:[#allocation5 + $0x128] sm:$0xff] %v572
    %829 = vst [vmem:[#allocation5 + $0x130] sm:$0xff] %v573
    %830 = vst [vmem:[#allocation5 + $0x138] sm:$0xff] %v574
    %831 = vst [vmem:[#allocation5 + $0x140] sm:$0xff] %v575
    %832 = vst [vmem:[#allocation5 + $0x148] sm:$0xff] %v576
    %833 = vst [vmem:[#allocation5 + $0x150] sm:$0xff] %v577
    %834 = vst [vmem:[#allocation5 + $0x158] sm:$0xff] %v578
    %835 = vst [vmem:[#allocation5 + $0x160] sm:$0xff] %v579
    %836 = vst [vmem:[#allocation5 + $0x168] sm:$0xff] %v580
    %837 = vst [vmem:[#allocation5 + $0x170] sm:$0xff] %v581
    %838 = vst [vmem:[#allocation5 + $0x178] sm:$0xff] %v582
    %839 = vst [vmem:[#allocation5 + $0x180] sm:$0xff] %v583
    %840 = vst [vmem:[#allocation5 + $0x188] sm:$0xff] %v584
    %841 = vst [vmem:[#allocation5 + $0x190] sm:$0xff] %v585
    %842 = vst [vmem:[#allocation5 + $0x198] sm:$0xff] %v586
    %843 = vst [vmem:[#allocation5 + $0x1a0] sm:$0xff] %v587
    %844 = vst [vmem:[#allocation5 + $0x1a8] sm:$0xff] %v588
    %845 = vst [vmem:[#allocation5 + $0x1b0] sm:$0xff] %v589
    %846 = vst [vmem:[#allocation5 + $0x1b8] sm:$0xff] %v590
    %847 = vst [vmem:[#allocation5 + $0x1c0] sm:$0xff] %v591
    %848 = vst [vmem:[#allocation5 + $0x1c8] sm:$0xff] %v592
    %849 = vst [vmem:[#allocation5 + $0x1d0] sm:$0xff] %v593
    %850 = vst [vmem:[#allocation5 + $0x1d8] sm:$0xff] %v594
    %851 = vst [vmem:[#allocation5 + $0x1e0] sm:$0xff] %v595
    %852 = vst [vmem:[#allocation5 + $0x1e8] sm:$0xff] %v596
    %853 = vst [vmem:[#allocation5 + $0x1f0] sm:$0xff] %v597
    %854 = vst [vmem:[#allocation5 + $0x1f8] sm:$0xff] %v598
    %855 = vst [vmem:[#allocation5 + $0x200] sm:$0xff] %v599
    %856 = vst [vmem:[#allocation5 + $0x208] sm:$0xff] %v600
    %857 = vst [vmem:[#allocation5 + $0x210] sm:$0xff] %v601
    %858 = vst [vmem:[#allocation5 + $0x218] sm:$0xff] %v602
    %859 = vst [vmem:[#allocation5 + $0x220] sm:$0xff] %v603
    %860 = vst [vmem:[#allocation5 + $0x228] sm:$0xff] %v604
    %861 = vst [vmem:[#allocation5 + $0x230] sm:$0xff] %v605
    %862 = vst [vmem:[#allocation5 + $0x238] sm:$0xff] %v606
    %863 = vst [vmem:[#allocation5 + $0x240] sm:$0xff] %v607
    %864 = vst [vmem:[#allocation5 + $0x248] sm:$0xff] %v608
    %865 = vst [vmem:[#allocation5 + $0x250] sm:$0xff] %v609
    %866 = vst [vmem:[#allocation5 + $0x258] sm:$0xff] %v610
    %867 = vst [vmem:[#allocation5 + $0x260] sm:$0xff] %v611
    %868 = vst [vmem:[#allocation5 + $0x268] sm:$0xff] %v612
    %869 = vst [vmem:[#allocation5 + $0x270] sm:$0xff] %v613
    %870 = vst [vmem:[#allocation5 + $0x278] sm:$0xff] %v614
    %871 = vst [vmem:[#allocation5 + $0x280] sm:$0xff] %v615
    %872 = vst [vmem:[#allocation5 + $0x288] sm:$0xff] %v616
    %873 = vst [vmem:[#allocation5 + $0x290] sm:$0xff] %v617
    %874 = vst [vmem:[#allocation5 + $0x298] sm:$0xff] %v618
    %875 = vst [vmem:[#allocation5 + $0x2a0] sm:$0xff] %v619
    %876 = vst [vmem:[#allocation5 + $0x2a8] sm:$0xff] %v620
    %877 = vst [vmem:[#allocation5 + $0x2b0] sm:$0xff] %v621
    %878 = vst [vmem:[#allocation5 + $0x2b8] sm:$0xff] %v622
    %879 = vst [vmem:[#allocation5 + $0x2c0] sm:$0xff] %v623
    %880 = vst [vmem:[#allocation5 + $0x2c8] sm:$0xff] %v624
    %881 = vst [vmem:[#allocation5 + $0x2d0] sm:$0xff] %v625
    %882 = vst [vmem:[#allocation5 + $0x2d8] sm:$0xff] %v626
    %883 = vst [vmem:[#allocation5 + $0x2e0] sm:$0xff] %v627
    %884 = vst [vmem:[#allocation5 + $0x2e8] sm:$0xff] %v628
    %885 = vst [vmem:[#allocation5 + $0x2f0] sm:$0xff] %v629
    %886 = vst [vmem:[#allocation5 + $0x2f8] sm:$0xff] %v630
    %887 = vst [vmem:[#allocation5 + $0x300] sm:$0xff] %v631
    %888 = vst [vmem:[#allocation5 + $0x308] sm:$0xff] %v632
    %889 = vst [vmem:[#allocation5 + $0x310] sm:$0xff] %v633
    %890 = vst [vmem:[#allocation5 + $0x318] sm:$0xff] %v634
    %891 = vst [vmem:[#allocation5 + $0x320] sm:$0xff] %v635
    %892 = vst [vmem:[#allocation5 + $0x328] sm:$0xff] %v636
    %893 = vst [vmem:[#allocation5 + $0x330] sm:$0xff] %v637
    %894 = vst [vmem:[#allocation5 + $0x338] sm:$0xff] %v638
    %895 = vst [vmem:[#allocation5 + $0x340] sm:$0xff] %v639
    %896 = vst [vmem:[#allocation5 + $0x348] sm:$0xff] %v640
    %897 = vst [vmem:[#allocation5 + $0x350] sm:$0xff] %v641
    %898 = vst [vmem:[#allocation5 + $0x358] sm:$0xff] %v642
    %899 = vst [vmem:[#allocation5 + $0x360] sm:$0xff] %v643
    %900 = vst [vmem:[#allocation5 + $0x368] sm:$0xff] %v644
    %901 = vst [vmem:[#allocation5 + $0x370] sm:$0xff] %v645
    %902 = vst [vmem:[#allocation5 + $0x378] sm:$0xff] %v646
    %903 = vst [vmem:[#allocation5 + $0x380] sm:$0xff] %v647
    %904 = vst [vmem:[#allocation5 + $0x388] sm:$0xff] %v648
    %905 = vst [vmem:[#allocation5 + $0x390] sm:$0xff] %v649
    %906 = vst [vmem:[#allocation5 + $0x398] sm:$0xff] %v650
    %907 = vst [vmem:[#allocation5 + $0x3a0] sm:$0xff] %v651
    %908 = vst [vmem:[#allocation5 + $0x3a8] sm:$0xff] %v652
    %909 = vst [vmem:[#allocation5 + $0x3b0] sm:$0xff] %v653
    %910 = vst [vmem:[#allocation5 + $0x3b8] sm:$0xff] %v654
    %911 = vst [vmem:[#allocation5 + $0x3c0] sm:$0xff] %v655
    %912 = vst [vmem:[#allocation5 + $0x3c8] sm:$0xff] %v656
    %913 = vst [vmem:[#allocation5 + $0x3d0] sm:$0xff] %v657
    %914 = vst [vmem:[#allocation5 + $0x3d8] sm:$0xff] %v658
    %915 = vst [vmem:[#allocation5 + $0x3e0] sm:$0xff] %v659
    %916 = vst [vmem:[#allocation5 + $0x3e8] sm:$0xff] %v660
    %917 = vst [vmem:[#allocation5 + $0x3f0] sm:$0xff] %v661
    %918 = vst [vmem:[#allocation5 + $0x3f8] sm:$0xff] %v662
    %919 = vst [vmem:[#allocation5 + $0x400] sm:$0xff] %v663
    %920 = vst [vmem:[#allocation5 + $0x408] sm:$0xff] %v664
    %921 = vst [vmem:[#allocation5 + $0x410] sm:$0xff] %v665
    %922 = vst [vmem:[#allocation5 + $0x418] sm:$0xff] %v666
    %923 = vst [vmem:[#allocation5 + $0x420] sm:$0xff] %v667
    %924 = vst [vmem:[#allocation5 + $0x428] sm:$0xff] %v668
    %925 = vst [vmem:[#allocation5 + $0x430] sm:$0xff] %v669
    %926 = vst [vmem:[#allocation5 + $0x438] sm:$0xff] %v670
    %927 = vst [vmem:[#allocation5 + $0x440] sm:$0xff] %v671
    %928 = vst [vmem:[#allocation5 + $0x448] sm:$0xff] %v672
    %929 = vst [vmem:[#allocation5 + $0x450] sm:$0xff] %v673
    %930 = vst [vmem:[#allocation5 + $0x458] sm:$0xff] %v674
    %931 = vst [vmem:[#allocation5 + $0x460] sm:$0xff] %v675
    %932 = vst [vmem:[#allocation5 + $0x468] sm:$0xff] %v676
    %933 = vst [vmem:[#allocation5 + $0x470] sm:$0xff] %v677
    %934 = vst [vmem:[#allocation5 + $0x478] sm:$0xff] %v678
    %935 = vst [vmem:[#allocation5 + $0x480] sm:$0xff] %v679
    %936 = vst [vmem:[#allocation5 + $0x488] sm:$0xff] %v680
    %937 = vst [vmem:[#allocation5 + $0x490] sm:$0xff] %v681
    %938 = vst [vmem:[#allocation5 + $0x498] sm:$0xff] %v682
    %939 = vst [vmem:[#allocation5 + $0x4a0] sm:$0xff] %v683
    %940 = vst [vmem:[#allocation5 + $0x4a8] sm:$0xff] %v684
    %941 = vst [vmem:[#allocation5 + $0x4b0] sm:$0xff] %v685
    %942 = vst [vmem:[#allocation5 + $0x4b8] sm:$0xff] %v686
    %943 = vst [vmem:[#allocation5 + $0x4c0] sm:$0xff] %v687
    %944 = vst [vmem:[#allocation5 + $0x4c8] sm:$0xff] %v688
    %945 = vst [vmem:[#allocation5 + $0x4d0] sm:$0xff] %v689
    %946 = vst [vmem:[#allocation5 + $0x4d8] sm:$0xff] %v690
    %947 = vst [vmem:[#allocation5 + $0x4e0] sm:$0xff] %v691
    %948 = vst [vmem:[#allocation5 + $0x4e8] sm:$0xff] %v692
    %949 = vst [vmem:[#allocation5 + $0x4f0] sm:$0xff] %v693
    %950 = vst [vmem:[#allocation5 + $0x4f8] sm:$0xff] %v694
    %951 = vst [vmem:[#allocation5 + $0x500] sm:$0xff] %v695
    %952 = vst [vmem:[#allocation5 + $0x508] sm:$0xff] %v696
    %953 = vst [vmem:[#allocation5 + $0x510] sm:$0xff] %v697
    %954 = vst [vmem:[#allocation5 + $0x518] sm:$0xff] %v698
    %955 = vst [vmem:[#allocation5 + $0x520] sm:$0xff] %v699
    %956 = vst [vmem:[#allocation5 + $0x528] sm:$0xff] %v700
    %957 = vst [vmem:[#allocation5 + $0x530] sm:$0xff] %v701
    %958 = vst [vmem:[#allocation5 + $0x538] sm:$0xff] %v702
    %959 = vst [vmem:[#allocation5 + $0x540] sm:$0xff] %v703
    %960 = vst [vmem:[#allocation5 + $0x548] sm:$0xff] %v704
    %961 = vst [vmem:[#allocation5 + $0x550] sm:$0xff] %v705
    %962 = vst [vmem:[#allocation5 + $0x558] sm:$0xff] %v706
    %963 = vst [vmem:[#allocation5 + $0x560] sm:$0xff] %v707
    %964 = vst [vmem:[#allocation5 + $0x568] sm:$0xff] %v708
    %965 = vst [vmem:[#allocation5 + $0x570] sm:$0xff] %v709
    %966 = vst [vmem:[#allocation5 + $0x578] sm:$0xff] %v710
    %967 = vst [vmem:[#allocation5 + $0x580] sm:$0xff] %v711
    %968 = vst [vmem:[#allocation5 + $0x588] sm:$0xff] %v712
    %969 = vst [vmem:[#allocation5 + $0x590] sm:$0xff] %v713
    %970 = vst [vmem:[#allocation5 + $0x598] sm:$0xff] %v714
    %971 = vst [vmem:[#allocation5 + $0x5a0] sm:$0xff] %v715
    %972 = vst [vmem:[#allocation5 + $0x5a8] sm:$0xff] %v716
    %973 = vst [vmem:[#allocation5 + $0x5b0] sm:$0xff] %v717
    %974 = vst [vmem:[#allocation5 + $0x5b8] sm:$0xff] %v718
    %975 = vst [vmem:[#allocation5 + $0x5c0] sm:$0xff] %v719
    %976 = vst [vmem:[#allocation5 + $0x5c8] sm:$0xff] %v720
    %977 = vst [vmem:[#allocation5 + $0x5d0] sm:$0xff] %v721
    %978 = vst [vmem:[#allocation5 + $0x5d8] sm:$0xff] %v722
    %979 = vst [vmem:[#allocation5 + $0x5e0] sm:$0xff] %v723
    %980 = vst [vmem:[#allocation5 + $0x5e8] sm:$0xff] %v724
    %981 = vst [vmem:[#allocation5 + $0x5f0] sm:$0xff] %v725
    %982 = vst [vmem:[#allocation5 + $0x5f8] sm:$0xff] %v726
    %983 = vst [vmem:[#allocation5 + $0x600] sm:$0xff] %v727
    %984 = vst [vmem:[#allocation5 + $0x608] sm:$0xff] %v728
    %985 = vst [vmem:[#allocation5 + $0x610] sm:$0xff] %v729
    %986 = vst [vmem:[#allocation5 + $0x618] sm:$0xff] %v730
    %987 = vst [vmem:[#allocation5 + $0x620] sm:$0xff] %v731
    %988 = vst [vmem:[#allocation5 + $0x628] sm:$0xff] %v732
    %989 = vst [vmem:[#allocation5 + $0x630] sm:$0xff] %v733
    %990 = vst [vmem:[#allocation5 + $0x638] sm:$0xff] %v734
    %991 = vst [vmem:[#allocation5 + $0x640] sm:$0xff] %v735
    %992 = vst [vmem:[#allocation5 + $0x648] sm:$0xff] %v736
    %993 = vst [vmem:[#allocation5 + $0x650] sm:$0xff] %v737
    %994 = vst [vmem:[#allocation5 + $0x658] sm:$0xff] %v738
    %995 = vst [vmem:[#allocation5 + $0x660] sm:$0xff] %v739
    %996 = vst [vmem:[#allocation5 + $0x668] sm:$0xff] %v740
    %997 = vst [vmem:[#allocation5 + $0x670] sm:$0xff] %v741
    %998 = vst [vmem:[#allocation5 + $0x678] sm:$0xff] %v742
    %999 = vst [vmem:[#allocation5 + $0x680] sm:$0xff] %v743
    %1000 = vst [vmem:[#allocation5 + $0x688] sm:$0xff] %v744
    %1001 = vst [vmem:[#allocation5 + $0x690] sm:$0xff] %v745
    %1002 = vst [vmem:[#allocation5 + $0x698] sm:$0xff] %v746
    %1003 = vst [vmem:[#allocation5 + $0x6a0] sm:$0xff] %v747
    %1004 = vst [vmem:[#allocation5 + $0x6a8] sm:$0xff] %v748
    %1005 = vst [vmem:[#allocation5 + $0x6b0] sm:$0xff] %v749
    %1006 = vst [vmem:[#allocation5 + $0x6b8] sm:$0xff] %v750
    %1007 = vst [vmem:[#allocation5 + $0x6c0] sm:$0xff] %v751
    %1008 = vst [vmem:[#allocation5 + $0x6c8] sm:$0xff] %v752
    %1009 = vst [vmem:[#allocation5 + $0x6d0] sm:$0xff] %v753
    %1010 = vst [vmem:[#allocation5 + $0x6d8] sm:$0xff] %v754
    %1011 = vst [vmem:[#allocation5 + $0x6e0] sm:$0xff] %v755
    %1012 = vst [vmem:[#allocation5 + $0x6e8] sm:$0xff] %v756
    %1013 = vst [vmem:[#allocation5 + $0x6f0] sm:$0xff] %v757
    %1014 = vst [vmem:[#allocation5 + $0x6f8] sm:$0xff] %v758
    %1015 = vst [vmem:[#allocation5 + $0x700] sm:$0xff] %v759
    %1016 = vst [vmem:[#allocation5 + $0x708] sm:$0xff] %v760
    %1017 = vst [vmem:[#allocation5 + $0x710] sm:$0xff] %v761
    %1018 = vst [vmem:[#allocation5 + $0x718] sm:$0xff] %v762
    %1019 = vst [vmem:[#allocation5 + $0x720] sm:$0xff] %v763
    %1020 = vst [vmem:[#allocation5 + $0x728] sm:$0xff] %v764
    %1021 = vst [vmem:[#allocation5 + $0x730] sm:$0xff] %v765
    %1022 = vst [vmem:[#allocation5 + $0x738] sm:$0xff] %v766
    %1023 = vst [vmem:[#allocation5 + $0x740] sm:$0xff] %v767
    %1024 = vst [vmem:[#allocation5 + $0x748] sm:$0xff] %v768
    %1025 = vst [vmem:[#allocation5 + $0x750] sm:$0xff] %v769
    %1026 = vst [vmem:[#allocation5 + $0x758] sm:$0xff] %v770
    %1027 = vst [vmem:[#allocation5 + $0x760] sm:$0xff] %v771
    %1028 = vst [vmem:[#allocation5 + $0x768] sm:$0xff] %v772
    %1029 = vst [vmem:[#allocation5 + $0x770] sm:$0xff] %v773
    %1030 = vst [vmem:[#allocation5 + $0x778] sm:$0xff] %v774
    %1031 = vst [vmem:[#allocation5 + $0x780] sm:$0xff] %v775
    %1032 = vst [vmem:[#allocation5 + $0x788] sm:$0xff] %v776
    %1033 = vst [vmem:[#allocation5 + $0x790] sm:$0xff] %v777
    %1034 = vst [vmem:[#allocation5 + $0x798] sm:$0xff] %v778
    %1035 = vst [vmem:[#allocation5 + $0x7a0] sm:$0xff] %v779
    %1036 = vst [vmem:[#allocation5 + $0x7a8] sm:$0xff] %v780
    %1037 = vst [vmem:[#allocation5 + $0x7b0] sm:$0xff] %v781
    %1038 = vst [vmem:[#allocation5 + $0x7b8] sm:$0xff] %v782
    %1039 = vst [vmem:[#allocation5 + $0x7c0] sm:$0xff] %v783
    %1040 = vst [vmem:[#allocation5 + $0x7c8] sm:$0xff] %v784
    %1041 = vst [vmem:[#allocation5 + $0x7d0] sm:$0xff] %v785
    %1042 = vst [vmem:[#allocation5 + $0x7d8] sm:$0xff] %v786
    %1043 = vst [vmem:[#allocation5 + $0x7e0] sm:$0xff] %v787
    %1044 = vst [vmem:[#allocation5 + $0x7e8] sm:$0xff] %v788
    %1045 = vst [vmem:[#allocation5 + $0x7f0] sm:$0xff] %v789
    %1046 = vst [vmem:[#allocation5 + $0x7f8] sm:$0xff] %v790
    // Predicated region
    $region10: #{tpu_custom_call.1} parent=1 // pred_check
      _
    $region11: #{tpu_custom_call.1} parent=1 // pred_check_branch
      %1048 = sbr.rel (0) target = $region13
    $region12: #{tpu_custom_call.1} parent=1 // pred_region
      %s1050 = ssub.s32 32768, 32768
      %1051 = vsyncadd [#allocation4], %s1050
      %s1052 = sshll.u32 [#allocation5], 4
      %s1053 = int_to_ptr.vmem [resolvable:$true] %s1052
      %1058 = dma.vmem_to_hbm [thread:$0]  %s1053, 32768, %s1, [#allocation4], 1024, 1024, 64
    $region13: #{tpu_custom_call.1} parent=1 // pred_fallthru
      _
    // Predicated region
    $region14: #{tpu_custom_call.1} parent=1 // pred_check
      _
    $region15: #{tpu_custom_call.1} parent=1 // pred_check_branch
      %1060 = sbr.rel (0) target = $region17
    $region16: #{tpu_custom_call.1} parent=1 // pred_region
      %1061 = dma.done [#allocation4], 32768
    $region17: #{tpu_custom_call.1} parent=1 // pred_fallthru
      _
    %1062 = vsyncpa [#allocation3], 1
    %1063 = vsyncpa [#allocation4], 1

</llo_original>
